<compile_context>
chip_gen: v5e
topology: v5e:2x2
jax: 0.10.0
libtpu: 0.0.40
codegen_flags: <defaults>
</compile_context>

<pallas_src>
import jax
import jax.numpy as jnp
from jax.experimental import pallas as pl
from jax.experimental.pallas import tpu as pltpu


def _pick_hw_tile(hw, channels, itemsize, max_block_bytes):
    """Largest lane-dense HW tile (multiple of 128) within a per-block byte budget."""
    if hw * channels * itemsize <= max_block_bytes:
        return hw  # whole spatial extent fits in a single block
    lanes = (max_block_bytes // max(1, channels * itemsize)) // 128 * 128
    return max(128, lanes)


def _make_pool_sum_kernel(hw_total, hw_tile):
    ragged = (hw_total % hw_tile) != 0

    def kernel(x_ref, sum_ref):
        # x_ref:   (1, C_in, hw_tile)  input tile
        # sum_ref: (1, 1, C_in, 1)     f32 partial-sum accumulator (resident across j)
        j = pl.program_id(2)

        @pl.when(j == 0)
        def _init():
            sum_ref[...] = jnp.zeros_like(sum_ref)

        x = x_ref[0].astype(jnp.float32)                      # (C_in, hw_tile), f32 accum
        if ragged:
            # Mask lanes past the true spatial extent (last tile reads OOB padding).
            tile_idx = pl.program_id(1) * pl.num_programs(2) + j
            lane = jax.lax.broadcasted_iota(jnp.int32, x.shape, 1)
            x = jnp.where(tile_idx * hw_tile + lane < hw_total, x, 0.0)
        sum_ref[0, 0] += jnp.sum(x, axis=-1, keepdims=True)   # (C_in, 1)

    return kernel


def _broadcast_kernel(y_ref, o_ref):
    # y_ref: (1, C_out, 1) activations; o_ref: (1, C_out, hw_tile) lane-dense output tile
    o_ref[0] = jnp.broadcast_to(y_ref[0], o_ref.shape[1:]).astype(o_ref.dtype)


def aspp_pooling(x, weight, gamma, beta, running_mean, running_var, eps=1e-5,
                 pool_block_bytes=4 * 1024 * 1024,
                 write_block_bytes=8 * 1024 * 1024):
    """x: (N, C_in, H, W); weight: (C_out, C_in) (1x1 conv weight, squeezed)."""
    N, C_in, H, W = x.shape
    C_out = weight.shape[0]
    HW = H * W
    out_itemsize = jnp.dtype(x.dtype).itemsize

    # ---------------- pass 1: HW-tiled global-sum reduction ----------------
    # Budget with the 4-byte f32 accumulation width so the in-kernel f32
    # intermediate of a (C_in, hw_tile) block stays within the VMEM budget even
    # for sub-32-bit inputs.
    hw_tile_r = _pick_hw_tile(HW, C_in, 4, pool_block_bytes)
    n_hw_tiles = pl.cdiv(HW, hw_tile_r)
    # Split the reduction across a second "parallel" grid axis so both
    # TensorCores (v7x) are used even when N is small; partials summed in JAX.
    num_splits = 2 if (n_hw_tiles >= 2 and n_hw_tiles % 2 == 0) else 1
    tiles_per_split = n_hw_tiles // num_splits

    x_flat = x.reshape(N, C_in, HW)

    partial_sums = pl.pallas_call(
        _make_pool_sum_kernel(HW, hw_tile_r),
        out_shape=jax.ShapeDtypeStruct((N, num_splits, C_in, 1), jnp.float32),
        grid_spec=pltpu.PrefetchScalarGridSpec(
            num_scalar_prefetch=0,
            grid=(N, num_splits, tiles_per_split),
            in_specs=[
                pl.BlockSpec((1, C_in, hw_tile_r),
                             lambda n, s, j: (n, 0, s * tiles_per_split + j)),
            ],
            out_specs=pl.BlockSpec((1, 1, C_in, 1), lambda n, s, j: (n, s, 0, 0)),
        ),
        compiler_params=pltpu.CompilerParams(
            dimension_semantics=("parallel", "parallel", "arbitrary"),
            vmem_limit_bytes=48 * 1024 * 1024),
    )(x_flat)

    # -------- tiny matmul + BN(eval) + ReLU in plain JAX (negligible FLOPs) --------
    # TODO(synk): training-mode BatchNorm (batch statistics) not implemented;
    # eval-mode running-stats semantics are used instead.
    pooled = partial_sums.sum(axis=1)[..., 0] * (1.0 / HW)          # (N, C_in) f32
    scale = (gamma / jnp.sqrt(running_var + eps)).astype(jnp.float32)
    w_folded = weight.astype(jnp.float32) * scale[:, None]          # fold BN scale into conv
    bias = (beta - running_mean * scale).astype(jnp.float32)
    y = jnp.maximum(pooled @ w_folded.T + bias[None, :], 0.0)       # (N, C_out)
    y3 = y.astype(x.dtype).reshape(N, C_out, 1)

    # ---------------- pass 2: lane-dense broadcast write ----------------
    hw_tile_w = _pick_hw_tile(HW, C_out, out_itemsize, write_block_bytes)

    out_flat = pl.pallas_call(
        _broadcast_kernel,
        out_shape=jax.ShapeDtypeStruct((N, C_out, HW), x.dtype),
        grid_spec=pltpu.PrefetchScalarGridSpec(
            num_scalar_prefetch=0,
            grid=(N, pl.cdiv(HW, hw_tile_w)),
            in_specs=[pl.BlockSpec((1, C_out, 1), lambda n, j: (n, 0, 0))],
            out_specs=pl.BlockSpec((1, C_out, hw_tile_w), lambda n, j: (n, 0, j)),
        ),
        compiler_params=pltpu.CompilerParams(
            dimension_semantics=("parallel", "parallel"),
            vmem_limit_bytes=48 * 1024 * 1024),
    )(y3)

    return out_flat.reshape(N, C_out, H, W)


def aspp_pooling_ref(x, weight, gamma, beta, running_mean, running_var, eps=1e-5):
    # pure-JAX reference (same semantics)
    pooled = jnp.mean(x, axis=(-2, -1))                           # (N, C_in)
    y = pooled @ weight.T                                         # (N, C_out)
    y = (y - running_mean) / jnp.sqrt(running_var + eps) * gamma + beta
    y = jnp.maximum(y, 0.0)
    N, C_out = y.shape
    H, W = x.shape[-2:]
    return jnp.broadcast_to(y[:, :, None, None], (N, C_out, H, W))


if __name__ == "__main__":
    key = jax.random.PRNGKey(0)
    N, C_in, C_out, H, W = 2, 4, 8, 16, 16

    k_x, k_w, k_g, k_b, k_m, k_v, k_x2 = jax.random.split(key, 7)
    x = jax.random.normal(k_x, (N, C_in, H, W), dtype=jnp.float32)
    # 1x1 conv weight (C_out, C_in, 1, 1) stored squeezed as (C_out, C_in)
    weight = jax.random.normal(k_w, (C_out, C_in), dtype=jnp.float32) * 0.1
    gamma = jax.random.normal(k_g, (C_out,), dtype=jnp.float32) * 0.1 + 1.0
    beta = jax.random.normal(k_b, (C_out,), dtype=jnp.float32) * 0.1
    running_mean = jax.random.normal(k_m, (C_out,), dtype=jnp.float32) * 0.1
    running_var = jax.random.uniform(k_v, (C_out,), dtype=jnp.float32,
                                     minval=0.5, maxval=1.5)
    params = (weight, gamma, beta, running_mean, running_var)

    # default path (small problem -> single HW block per pass)
    out = jax.block_until_ready(aspp_pooling(x, *params))
    ref = aspp_pooling_ref(x, *params)
    assert out.shape == (N, C_out, H, W)
    assert jnp.allclose(out, ref, atol=1e-5, rtol=1e-5)

    # force the HW-tiled path (tile=128 -> 2 tiles -> 2-way parallel reduction split)
    out_tiled = jax.block_until_ready(
        aspp_pooling(x, *params,
                     pool_block_bytes=128 * C_in * 4,
                     write_block_bytes=128 * C_out * 4))
    assert jnp.allclose(out_tiled, ref, atol=1e-5, rtol=1e-5)

    # force the ragged-tail path (HW=324 -> 3 tiles of 128, masked remainder reads,
    # OOB output writes dropped)
    x_rag = jax.random.normal(k_x2, (N, C_in, 18, 18), dtype=jnp.float32)
    ref_rag = aspp_pooling_ref(x_rag, *params)
    out_rag = jax.block_until_ready(
        aspp_pooling(x_rag, *params,
                     pool_block_bytes=128 * C_in * 4,
                     write_block_bytes=128 * C_out * 4))
    assert jnp.allclose(out_rag, ref_rag, atol=1e-5, rtol=1e-5)

    print("KERNEL_OK")
</pallas_src>

<mosaic_0001>
module attributes {stable_mosaic.version = 11 : i64} {
  func.func @kernel(%arg0: i32, %arg1: i32, %arg2: i32, %arg3: memref<1x4x256xf32, #tpu.memory_space<vmem>>, %arg4: memref<1x1x4x1xf32, #tpu.memory_space<vmem>>) attributes {dimension_semantics = [#tpu.dimension_semantics<parallel>, #tpu.dimension_semantics<parallel>, #tpu.dimension_semantics<arbitrary>], iteration_bounds = array<i64: 2, 1, 1>, scalar_prefetch = 0 : i64, scratch_operands = 0 : i64, tpu.core_type = #tpu.core_type<tc>, window_params = [{transform_indices = @transform_0, window_bounds = array<i64: 1, 4, 256>}, {transform_indices = @transform_1, window_bounds = array<i64: 1, 1, 4, 1>}]} {
    %c0_i32 = arith.constant 0 : i32
    %0 = arith.cmpi eq, %arg2, %c0_i32 : i32
    %1 = arith.extui %0 : i1 to i32
    %c0_i32_0 = arith.constant 0 : i32
    %2 = arith.cmpi ne, %1, %c0_i32_0 : i32
    scf.if %2 {
      %cst_11 = arith.constant 0.000000e+00 : f32
      %13 = vector.broadcast %cst_11 : f32 to vector<1x1x4x1xf32>
      %c0_12 = arith.constant 0 : index
      %c0_13 = arith.constant 0 : index
      %c0_14 = arith.constant 0 : index
      %c0_15 = arith.constant 0 : index
      %14 = vector.load %arg4[%c0_12, %c0_13, %c0_14, %c0_15] : memref<1x1x4x1xf32, #tpu.memory_space<vmem>>, vector<1x1x4x1xf32>
      tpu.vector_store %arg4[%c0_12, %c0_13, %c0_14, %c0_15], %13 {strides = array<i32>} : memref<1x1x4x1xf32, #tpu.memory_space<vmem>>, vector<1x1x4x1xf32>,
    } else {
    }
    %c0 = arith.constant 0 : index
    %c0_1 = arith.constant 0 : index
    %c0_2 = arith.constant 0 : index
    %3 = vector.load %arg3[%c0, %c0_1, %c0_2] : memref<1x4x256xf32, #tpu.memory_space<vmem>>, vector<1x4x256xf32>
    %4 = vector.shape_cast %3 : vector<1x4x256xf32> to vector<4x256xf32>
    %c0_3 = arith.constant 0 : index
    %c0_4 = arith.constant 0 : index
    %c0_5 = arith.constant 0 : index
    %c0_6 = arith.constant 0 : index
    %5 = vector.load %arg4[%c0_3, %c0_4, %c0_5, %c0_6] : memref<1x1x4x1xf32, #tpu.memory_space<vmem>>, vector<1x1x4x1xf32>
    %6 = vector.shape_cast %5 : vector<1x1x4x1xf32> to vector<4x1xf32>
    %cst = arith.constant dense<0.000000e+00> : vector<4xf32>
    %7 = vector.multi_reduction <add>, %4, %cst [1] : vector<4x256xf32> to vector<4xf32>
    %8 = vector.shape_cast %7 : vector<4xf32> to vector<4x1xf32>
    %9 = arith.addf %6, %8 : vector<4x1xf32>
    %c0_7 = arith.constant 0 : index
    %c0_8 = arith.constant 0 : index
    %c0_9 = arith.constant 0 : index
    %c0_10 = arith.constant 0 : index
    %10 = vector.load %arg4[%c0_7, %c0_8, %c0_9, %c0_10] : memref<1x1x4x1xf32, #tpu.memory_space<vmem>>, vector<1x1x4x1xf32>
    %11 = vector.shape_cast %10 : vector<1x1x4x1xf32> to vector<4x1xf32>
    %12 = vector.shape_cast %9 : vector<4x1xf32> to vector<1x1x4x1xf32>
    tpu.vector_store %arg4[%c0_7, %c0_8, %c0_9, %c0_10], %12 {strides = array<i32>} : memref<1x1x4x1xf32, #tpu.memory_space<vmem>>, vector<1x1x4x1xf32>,
    return
  }
  func.func @transform_0(%arg0: i32, %arg1: i32, %arg2: i32) -> (i32, i32, i32) {
    %c1_i32 = arith.constant 1 : i32
    %0 = arith.muli %arg1, %c1_i32 : i32
    %1 = arith.addi %0, %arg2 : i32
    %c0_i32 = arith.constant 0 : i32
    %c0_i32_0 = arith.constant 0 : i32
    return %arg0, %c0_i32, %1 : i32, i32, i32
  }
  func.func @transform_1(%arg0: i32, %arg1: i32, %arg2: i32) -> (i32, i32, i32, i32) {
    %c0_i32 = arith.constant 0 : i32
    %c0_i32_0 = arith.constant 0 : i32
    %c0_i32_1 = arith.constant 0 : i32
    return %arg0, %arg1, %c0_i32, %c0_i32_0 : i32, i32, i32, i32
  }
}

</mosaic_0001>

<llo_original>
// kernel: tpu_custom_call.1
$region0: #{tpu_custom_call.1}
  #allocation0 [shape = 'u32[]', space=smem, size = 0x4, offset = 0x4, fixed_abs, tag = 'smem constant byte address 0x4 - core index']
  #allocation1 [shape = 'u32[72,128]{1,0:T(1,128)}', space=vmem, size = 0x9000, scoped, tag = 'internal scratch']
  %s0 = inlined_call_operand.hbm [shape: f32[2,4,256], index: 0, kind: input, shape index: {}]
  %s1 = inlined_call_operand.vmem [shape: f32[2,1,4,1], index: 1, kind: output, shape index: {}]
  %s2 = sld [smem:[#allocation0]]
  $region45: #{tpu_custom_call.1} parent=0
    _
  %s4 = ssub.s32 1, %s2
  %s5 = scalar_select 0, %s4, %s2
  $region1: #{tpu_custom_call.1} parent=0
    #allocation2 [shape = 'u8[8192]{0}', space=vmem, size = 0x2000, scoped, tag = 'input window, operand 0']
    #allocation3 [shape = 's32[2]{0}', space=sflag, size = 0x8, scoped, tag = 'scoped memory for tpu_custom_call.1']
    %6 = vsyncpa [#allocation3], 0
    %s7 = scalar_lea.sflag [#allocation3], 1
    %8 = vsyncpa %s7, 0
    loop: start=0, step=1, limit=4
    $region2: #{tpu_custom_call.1} parent=1 // loop_pre_header
      _
    $region3: #{tpu_custom_call.1} parent=1 // loop_header
      %s10 = sphi 0, %s14
      %p11 = scmp.ge.s32.totalorder %s10, 4
      %s17 = sphi 0, %s36
      %s18 = sphi 0, %s32
      %s19 = sphi 0, %s28
      %s20 = sphi 0, %s17
      %s21 = sphi 0, %s18
      %s22 = sphi 0, %s19
      %s23 = sphi 0, %s20
      %s24 = sphi 0, %s21
      %s25 = sphi 0, %s22
      %s43 = sphi 0, %s45
      %s46 = sphi 0, %s43
      %s47 = sphi 0, %s46
      %s63 = sphi 0, %s47
      %s71 = sphi 0, %s73
      %s74 = sphi 0, %s71
      %s75 = sphi 0, %s74
      %s91 = sphi 0, %s75
    $region4: #{tpu_custom_call.1} parent=1 // loop_header_branch
      %13 = sbr.rel (%p11) target = $region8
    $region5: #{tpu_custom_call.1} parent=1 // loop_body
      %s15 = ssub.s32 %s10, 1
      %s16 = ssub.s32 %s10, 2
      %s26 = sadd.s32 1, %s19
      %p27 = scmp.ge.s32.totalorder %s26, 1
      %s28 = scalar_select %p27, 0, %s26
      %s29 = sadd.s32 1, %s18
      %s30 = scalar_select %p27, %s29, %s18
      %p31 = scmp.ge.s32.totalorder %s30, 1
      %s32 = scalar_select %p31, 0, %s30
      %s33 = sadd.s32 1, %s17
      %s34 = scalar_select %p31, %s33, %s17
      %p35 = scmp.ge.s32.totalorder %s34, 2
      %s36 = scalar_select %p35, 0, %s34
      %s37 = sadd.s32 %s18, %s19
      %s38 = sadd.s32 %s32, %s28
      %s39 = ssub.s32 %s17, %s36
      %s40 = ssub.s32 %s37, %s38
      %s41 = sor.u32 %s39, %s40
      %p42 = scmp.eq.s32.totalorder %s41, 0
      %s44 = sadd.s32 %s43, 1
      %s45 = scalar_select %p42, %s43, %s44
      %p48 = pneg %p42
      %p49 = scmp.eq.s32.totalorder %s10, 1
      %p50 = por %p48, %p49
      %p51 = scmp.ne.s32.totalorder %s43, %s46
      %p52 = scmp.eq.s32.totalorder %s10, 0
      %p53 = por %p51, %p52
      %p54 = scmp.ne.s32.totalorder %s43, %s46
      %p55 = scmp.eq.s32.totalorder %s15, 1
      %p56 = por %p54, %p55
      %p57 = scmp.ne.s32.totalorder %s46, %s47
      %p58 = scmp.eq.s32.totalorder %s15, 0
      %p59 = por %p57, %p58
      %p60 = scmp.ne.s32.totalorder %s46, %s47
      %p61 = scmp.eq.s32.totalorder %s16, 1
      %p62 = por %p60, %p61
      %p64 = scmp.ne.s32.totalorder %s47, %s63
      %p65 = scmp.eq.s32.totalorder %s16, 0
      %p66 = por %p64, %p65
      %s67 = ssub.s32 %s17, %s36
      %s68 = ssub.s32 %s18, %s32
      %s69 = sor.u32 %s67, %s68
      %p70 = scmp.eq.s32.totalorder %s69, 0
      %s72 = sadd.s32 %s71, 1
      %s73 = scalar_select %p70, %s71, %s72
      %p76 = pneg %p70
      %p77 = scmp.eq.s32.totalorder %s10, 1
      %p78 = por %p76, %p77
      %p79 = scmp.ne.s32.totalorder %s71, %s74
      %p80 = scmp.eq.s32.totalorder %s10, 0
      %p81 = por %p79, %p80
      %p82 = scmp.ne.s32.totalorder %s71, %s74
      %p83 = scmp.eq.s32.totalorder %s15, 1
      %p84 = por %p82, %p83
      %p85 = scmp.ne.s32.totalorder %s74, %s75
      %p86 = scmp.eq.s32.totalorder %s15, 0
      %p87 = por %p85, %p86
      %p88 = scmp.ne.s32.totalorder %s74, %s75
      %p89 = scmp.eq.s32.totalorder %s16, 1
      %p90 = por %p88, %p89
      %p92 = scmp.ne.s32.totalorder %s75, %s91
      %p93 = scmp.eq.s32.totalorder %s16, 0
      %p94 = por %p92, %p93
      %p95 = scmp.le.s32.totalorder 1, %s10
      %p96 = scmp.lt.s32.totalorder %s10, 3
      %p97 = pnand %p95, %p96
      %p98 = pneg %p97
      // Predicated region
      $region9: #{tpu_custom_call.1} parent=5 // pred_check
        _
      $region10: #{tpu_custom_call.1} parent=5 // pred_check_branch
        %100 = sbr.rel (%p97) target = $region12
      $region11: #{tpu_custom_call.1} parent=5 // pred_region
        %s101 = ssub.s32 %s10, 1
      $region12: #{tpu_custom_call.1} parent=5 // pred_fallthru
        _
      %p102 = scmp.lt.s32.totalorder %s10, 2
      // Predicated region
      $region13: #{tpu_custom_call.1} parent=5 // pred_check
        %p103 = pneg %p102
      $region14: #{tpu_custom_call.1} parent=5 // pred_check_branch
        %105 = sbr.rel (%p103) target = $region16
      $region15: #{tpu_custom_call.1} parent=5 // pred_region
        // Predicated region
        $region17: #{tpu_custom_call.1} parent=15 // pred_check
          %p106 = pneg %p53
        $region18: #{tpu_custom_call.1} parent=15 // pred_check_branch
          %108 = sbr.rel (%p106) target = $region20
        $region19: #{tpu_custom_call.1} parent=15 // pred_region
          %s109 = sand.u32 %s43, 1
          %s110 = scalar_lea.sflag [#allocation3], %s109
          %s111 = sand.u32 %s43, 1
          %s112 = smul.addr %s111, 8
          %s113 = scalar_lea.vmem [#allocation2], %s112
          %s114 = sadd.s32 %s18, %s19
          %s115 = smul.u32 2, %s114
          %117 = vsyncadd %s110, 0
          %s118 = smul.addr %s17, 2
          %s119 = sadd.s32 %s115, %s118
          %s120 = smul.addr %s119, 4
          %s121 = scalar_lea.hbm %s0, %s120
          %s123 = sshll.u32 %s121, 4
          %s124 = int_to_ptr.hbm [resolvable:$true] %s123
          %s125 = sshll.u32 %s113, 4
          %s126 = int_to_ptr.vmem [resolvable:$true] %s125
          %128 = dma.hbm_to_vmem [thread:$0]  %s124, 128, %s126, %s110
        $region20: #{tpu_custom_call.1} parent=15 // pred_fallthru
          _
      $region16: #{tpu_custom_call.1} parent=5 // pred_fallthru
        _
      %p129 = scmp.le.s32.totalorder 1, %s10
      %p130 = scmp.lt.s32.totalorder %s10, 3
      %p131 = pnand %p129, %p130
      %p132 = pneg %p131
      // Predicated region
      $region21: #{tpu_custom_call.1} parent=5 // pred_check
        _
      $region22: #{tpu_custom_call.1} parent=5 // pred_check_branch
        %134 = sbr.rel (%p131) target = $region24
      $region23: #{tpu_custom_call.1} parent=5 // pred_region
        %s135 = ssub.s32 %s10, 1
        %s136 = sand.u32 %s46, 1
        %s137 = scalar_lea.sflag [#allocation3], %s136
        %s138 = sand.u32 %s46, 1
        %s139 = smul.addr %s138, 8
        %s140 = scalar_lea.vmem [#allocation2], %s139
        // Predicated region
        $region25: #{tpu_custom_call.1} parent=23 // pred_check
          %p141 = pneg %p59
        $region26: #{tpu_custom_call.1} parent=23 // pred_check_branch
          %143 = sbr.rel (%p141) target = $region28
        $region27: #{tpu_custom_call.1} parent=23 // pred_region
          %145 = dma.done %s137, 128
        $region28: #{tpu_custom_call.1} parent=23 // pred_fallthru
          _
        %s146 = sand.u32 %s46, 1
        %s147 = scalar_lea.sflag [#allocation3], %s146
        %s148 = sand.u32 %s46, 1
        %s149 = smul.addr %s148, 8
        %s150 = scalar_lea.vmem [#allocation2], %s149
        %p151 = pneg %p59
        %p152 = pneg %p56
        %p153 = pneg %p87
        %p154 = pneg %p84
        %p155 = scmp.lt.s32.totalorder %s20, 1
        %s156 = scalar_select %p155, %s20, 1
        %p157 = scmp.lt.s32.totalorder %s21, 0
        %s158 = scalar_select %p157, %s21, 0
        %s159 = sadd.s32 %s158, %s156
        %s160 = smul.addr %s159, 4
        %s161 = scalar_lea.vmem %s1, %s160
        %s162 = sadd.s32 %s21, %s22
        %s163 = smul.u32 2, %s162
        %p164 = scmp.lt.s32.totalorder %s20, 1
        %s165 = scalar_select %p164, %s20, 1
        %p166 = scmp.lt.s32.totalorder %s21, 0
        %s167 = scalar_select %p166, %s21, 0
        %s168 = sadd.s32 %s167, %s165
        %s169 = smul.addr %s168, 4
        %s170 = scalar_lea.vmem %s1, %s169
        %p171 = scmp.eq.s32.totalorder %s22, 0
        // Predicated region
        $region29: #{tpu_custom_call.1} parent=23 // pred_check
          %p172 = pneg %p171
        $region30: #{tpu_custom_call.1} parent=23 // pred_check_branch
          %174 = sbr.rel (%p172) target = $region32
        $region31: #{tpu_custom_call.1} parent=23 // pred_region
          %vm175 = vcmask 3072
          %176 = vst.msk [vmem:[%s170] sm:$0xf] %vm175, 0.0
        $region32: #{tpu_custom_call.1} parent=23 // pred_fallthru
          _
        %v177 = vld [vmem:[%s140] sm:$0xff]
        %v178 = vld [vmem:[%s170] sm:$0xf]
        %180 = vst [vmem:[#allocation1] ss:$2 sm:$0xff] %v177
        %v181 = vld.sshfl [vmem:[#allocation1] sm:$0xff pattern:$0x75316420]
        %v182 = vld.sshfl [vmem:[#allocation1 + $0x8] sm:$0xff pattern:$0x75316420]
        %vm185 = vcmask 1043456
        %v186 = vsel %vm185, %v181, 0.0
        %v187 = vsel %vm185, %v182, 0.0
        %v188 = vadd.f32 %v186, %v187
        %189 = vadd.xlane.f32.xlu0 %v188
        %v190 = vpop.xlane.xlu0 %189
        %v191 = vadd.f32 %v178, %v190
        %vm192 = vcmask 3072
        %193 = vst.msk [vmem:[%s170] sm:$0xf] %vm192, %v191
        %p194 = scmp.lt.s32.totalorder %s20, 1
        %s195 = scalar_select %p194, %s20, 1
        %p196 = scmp.lt.s32.totalorder %s21, 0
        %s197 = scalar_select %p196, %s21, 0
        %s198 = sadd.s32 %s197, %s195
        %s199 = smul.addr %s198, 4
        %s200 = scalar_lea.vmem %s1, %s199
        // Predicated region
        $region33: #{tpu_custom_call.1} parent=23 // pred_check
          %p201 = pneg %p84
        $region34: #{tpu_custom_call.1} parent=23 // pred_check_branch
          %203 = sbr.rel (%p201) target = $region36
        $region35: #{tpu_custom_call.1} parent=23 // pred_region
          _
        $region36: #{tpu_custom_call.1} parent=23 // pred_fallthru
          _
      $region24: #{tpu_custom_call.1} parent=5 // pred_fallthru
        _
      %p204 = scmp.le.s32.totalorder 2, %s10
      // Predicated region
      $region37: #{tpu_custom_call.1} parent=5 // pred_check
        %p205 = pneg %p204
      $region38: #{tpu_custom_call.1} parent=5 // pred_check_branch
        %207 = sbr.rel (%p205) target = $region40
      $region39: #{tpu_custom_call.1} parent=5 // pred_region
        %s208 = ssub.s32 %s10, 2
        // Predicated region
        $region41: #{tpu_custom_call.1} parent=39 // pred_check
          %p209 = pneg %p90
        $region42: #{tpu_custom_call.1} parent=39 // pred_check_branch
          %211 = sbr.rel (%p209) target = $region44
        $region43: #{tpu_custom_call.1} parent=39 // pred_region
          %p212 = scmp.lt.s32.totalorder %s23, 1
          %s213 = scalar_select %p212, %s23, 1
          %p214 = scmp.lt.s32.totalorder %s24, 0
          %s215 = scalar_select %p214, %s24, 0
          %s216 = sadd.s32 %s215, %s213
          %s217 = smul.addr %s216, 4
          %s218 = scalar_lea.vmem %s1, %s217
        $region44: #{tpu_custom_call.1} parent=39 // pred_fallthru
          _
      $region40: #{tpu_custom_call.1} parent=5 // pred_fallthru
        _
    $region6: #{tpu_custom_call.1} parent=1 // loop_footer
      %s14 = sadd.s32 1, %s10
    $region7: #{tpu_custom_call.1} parent=1 // loop_footer_branch
      %9 = sbr.rel target = $region3
    $region8: #{tpu_custom_call.1} parent=1 // loop_exit
      _
    %219 = vsyncpa [#allocation3], 1
    %s220 = scalar_lea.sflag [#allocation3], 1
    %221 = vsyncpa %s220, 1

</llo_original>
